<compile_context>
chip_gen: v7x
topology: tpu7x:2x2x1
jax: 0.10.0
libtpu: 0.0.40
codegen_flags: <defaults>
</compile_context>

<pallas_src>
import functools
import math

import jax
import jax.numpy as jnp
from jax.experimental import pallas as pl
from jax.experimental.pallas import tpu as pltpu


_VMEM_LIMIT_BYTES = 32 * 1024 * 1024   # explicit scoped-VMEM limit (safe on v5e/v6e/v7x)
_TILE_BUDGET_BYTES = 16 * 1024 * 1024  # double-buffered in+out streams per pass
_ROW_CAP = 1024                        # 512-1024 rows ~ HBM roofline sweet spot


def _divisors(n):
    ds = set()
    i = 1
    while i * i <= n:
        if n % i == 0:
            ds.add(i)
            ds.add(n // i)
        i += 1
    return sorted(ds)


def _pick_fold(c, m):
    """Fold factor k so that k*C is a multiple of 128 (lane-dense blocks)."""
    if c % 128 == 0:
        return 1
    k = 128 // math.gcd(c, 128)
    return k if m % k == 0 else 1


def _pick_tm(m_rows, c_lanes, in_bytes, out_bytes):
    """Largest row tile that divides the row count, fits the double-buffered
    in+out VMEM budget, and is sublane-aligned (8, or 16 for 16-bit dtypes)."""
    align = 16 if min(in_bytes, out_bytes) == 2 else 8
    bytes_per_row = 2 * c_lanes * (in_bytes + out_bytes)   # x-in + y-out, 2 buffers each
    max_rows = max(1, _TILE_BUDGET_BYTES // bytes_per_row)
    max_rows = min(max_rows, _ROW_CAP, m_rows)
    divs = _divisors(m_rows)
    aligned = [d for d in divs if d <= max_rows and d % align == 0]
    if aligned:
        return max(aligned)
    if m_rows <= max_rows:
        return m_rows                  # full-extent block is always a legal block shape
    # TODO(synk): pathological row counts (huge with no aligned divisor) would need
    # ragged-tile masking; fall back to the largest fitting divisor for now.
    return max(d for d in divs if d <= max_rows)


def _stats_kernel(x_ref, sum_ref, sq_ref, sum_sc, sq_sc, *, tm):
    """Accumulate per-lane sum / sum-of-squares into a vreg-shaped (8, C2) scratch
    using plain elementwise adds in the hot loop; emit the raw (8, C2) partials for
    this grid split in the final step (sublane/fold collapse done outside)."""
    i = pl.program_id(1)

    @pl.when(i == 0)
    def _init():
        sum_sc[...] = jnp.zeros_like(sum_sc)
        sq_sc[...] = jnp.zeros_like(sq_sc)

    x = x_ref[...].astype(jnp.float32)          # (tm, C2)
    c2 = x.shape[-1]
    if tm % 8 == 0:
        xr = x.reshape(tm // 8, 8, c2)          # vreg-aligned regrouping, no relayout
        sum_sc[...] += jnp.sum(xr, axis=0)      # pure VPU adds of vregs
        sq_sc[...] += jnp.sum(xr * xr, axis=0)
    else:                                       # tiny-shape fallback (tm == full rows < 8)
        sum_sc[0:1, :] += jnp.sum(x, axis=0, keepdims=True)
        sq_sc[0:1, :] += jnp.sum(x * x, axis=0, keepdims=True)

    @pl.when(i == pl.num_programs(1) - 1)
    def _emit():
        sum_ref[0] = sum_sc[...]
        sq_ref[0] = sq_sc[...]


def _normalize_kernel(x_ref, scale_ref, bias_ref, o_ref):
    """y = x * scale + bias with scale/bias pre-folded from gamma/beta/mean/var."""
    x = x_ref[...].astype(jnp.float32)
    o_ref[...] = (x * scale_ref[...] + bias_ref[...]).astype(o_ref.dtype)


def batch_norm_ts(x, gamma, beta, *, eps=1e-5):
    """x: (N, L, C); gamma/beta: (C,). Training-mode BatchNorm1d over C."""
    N, L, C = x.shape
    M = N * L
    in_bytes = jnp.dtype(x.dtype).itemsize
    out_bytes = in_bytes

    # Lane-dense view: (M, C) -> (M2, C2) with C2 = k*C a multiple of 128 when possible.
    k = _pick_fold(C, M)
    M2, C2 = M // k, k * C
    x2 = x.reshape(M2, C2)                      # free row-major view

    tm = _pick_tm(M2, C2, in_bytes, out_bytes)
    steps_total = M2 // tm
    # Split pass-1 reduction into 2 independent partial sums so v7x's 2 TCs both work
    # (harmless on single-TC chips: just 2 sequential groups).
    n_split = 2 if (steps_total % 2 == 0 and steps_total >= 2) else 1
    steps = steps_total // n_split

    # ---- pass 1: per-lane partial sums / sums of squares ----
    stats_cost = pl.CostEstimate(
        flops=3 * M * C, transcendentals=0,
        bytes_accessed=M * C * in_bytes + 2 * n_split * 8 * C2 * 4)
    part_sum, part_sq = pl.pallas_call(
        functools.partial(_stats_kernel, tm=tm),
        out_shape=(
            jax.ShapeDtypeStruct((n_split, 8, C2), jnp.float32),
            jax.ShapeDtypeStruct((n_split, 8, C2), jnp.float32),
        ),
        grid_spec=pltpu.PrefetchScalarGridSpec(
            num_scalar_prefetch=0,
            grid=(n_split, steps),
            in_specs=[pl.BlockSpec((tm, C2), lambda p, i: (p * steps + i, 0))],
            out_specs=[
                pl.BlockSpec((1, 8, C2), lambda p, i: (p, 0, 0)),
                pl.BlockSpec((1, 8, C2), lambda p, i: (p, 0, 0)),
            ],
            scratch_shapes=[
                pltpu.VMEM((8, C2), jnp.float32),
                pltpu.VMEM((8, C2), jnp.float32),
            ],
        ),
        compiler_params=pltpu.CompilerParams(
            dimension_semantics=("parallel", "arbitrary"),
            vmem_limit_bytes=_VMEM_LIMIT_BYTES),
        cost_estimate=stats_cost,
    )(x2)

    # ---- tiny JAX epilogue: collapse partials, fold affine into scale/bias ----
    lane_sum = part_sum.sum(axis=(0, 1))            # (C2,)
    lane_sq = part_sq.sum(axis=(0, 1))
    ch_sum = lane_sum.reshape(k, C).sum(axis=0)     # (C,)
    ch_sq = lane_sq.reshape(k, C).sum(axis=0)
    inv_m = jnp.float32(1.0 / M)
    mean = ch_sum * inv_m
    # Single-pass E[x^2] - mean^2 (biased var, as PyTorch uses for normalization);
    # clamp guards small negative values from cancellation when |mean| >> std.
    var = jnp.maximum(ch_sq * inv_m - mean * mean, 0.0)
    scale = gamma.astype(jnp.float32) * jax.lax.rsqrt(var + jnp.float32(eps))
    bias = beta.astype(jnp.float32) - mean * scale
    scale2 = jnp.tile(scale, k).reshape(1, C2)      # lane-folded broadcast rows
    bias2 = jnp.tile(bias, k).reshape(1, C2)

    # ---- pass 2: y = x * scale + bias ----
    norm_cost = pl.CostEstimate(
        flops=2 * M * C, transcendentals=0,
        bytes_accessed=M * C * (in_bytes + out_bytes) + 2 * C2 * 4)
    y2 = pl.pallas_call(
        _normalize_kernel,
        out_shape=jax.ShapeDtypeStruct((M2, C2), x.dtype),
        grid_spec=pltpu.PrefetchScalarGridSpec(
            num_scalar_prefetch=0,
            grid=(steps_total,),
            in_specs=[
                pl.BlockSpec((tm, C2), lambda i: (i, 0)),
                pl.BlockSpec((1, C2), lambda i: (0, 0)),
                pl.BlockSpec((1, C2), lambda i: (0, 0)),
            ],
            out_specs=pl.BlockSpec((tm, C2), lambda i: (i, 0)),
        ),
        compiler_params=pltpu.CompilerParams(
            dimension_semantics=("parallel",),
            vmem_limit_bytes=_VMEM_LIMIT_BYTES),
        cost_estimate=norm_cost,
    )(x2, scale2, bias2)

    return y2.reshape(N, L, C)


def batch_norm_ts_ref(x, gamma, beta, eps=1e-5):
    """Pure-JAX reference matching PyTorch BatchNorm1d training forward."""
    xf = x.astype(jnp.float32)
    mean = jnp.mean(xf, axis=(0, 1), keepdims=True)
    var = jnp.mean((xf - mean) ** 2, axis=(0, 1), keepdims=True)  # biased
    y = (xf - mean) / jnp.sqrt(var + eps) * gamma.reshape(1, 1, -1) + beta.reshape(1, 1, -1)
    return y.astype(x.dtype)


if __name__ == "__main__":
    key = jax.random.PRNGKey(0)
    kx, kg, kb, kx2 = jax.random.split(key, 4)

    # Small shape matching the module: (N, L, C) time series, BatchNorm1d(C)
    N, L, C = 2, 8, 32
    x = jax.random.normal(kx, (N, L, C), dtype=jnp.float32)
    gamma = 1.0 + 0.1 * jax.random.normal(kg, (C,), dtype=jnp.float32)
    beta = 0.1 * jax.random.normal(kb, (C,), dtype=jnp.float32)

    y = jax.block_until_ready(batch_norm_ts(x, gamma, beta))
    y_ref = batch_norm_ts_ref(x, gamma, beta)
    assert y.shape == (N, L, C)
    assert jnp.allclose(y, y_ref, atol=1e-5, rtol=1e-5), "mismatch vs reference (small)"

    # Larger shape to exercise multi-tile accumulation + 2-way stats split.
    Nb, Lb = 8, 1024
    xb = jax.random.normal(kx2, (Nb, Lb, C), dtype=jnp.float32) + 0.5
    yb = jax.block_until_ready(batch_norm_ts(xb, gamma, beta))
    yb_ref = batch_norm_ts_ref(xb, gamma, beta)
    assert jnp.allclose(yb, yb_ref, atol=1e-4, rtol=1e-4), "mismatch vs reference (large)"

    print("KERNEL_OK")
</pallas_src>

<mosaic_0001>
module attributes {stable_mosaic.version = 11 : i64} {
  func.func @_stats_kernel(%arg0: i32, %arg1: i32, %arg2: memref<4x128xf32, #tpu.memory_space<vmem>>, %arg3: memref<1x8x128xf32, #tpu.memory_space<vmem>>, %arg4: memref<1x8x128xf32, #tpu.memory_space<vmem>>, %arg5: memref<8x128xf32, #tpu.memory_space<vmem>>, %arg6: memref<8x128xf32, #tpu.memory_space<vmem>>) attributes {dimension_semantics = [#tpu.dimension_semantics<parallel>, #tpu.dimension_semantics<arbitrary>], iteration_bounds = array<i64: 1, 1>, scalar_prefetch = 0 : i64, scratch_operands = 2 : i64, tpu.core_type = #tpu.core_type<tc>, window_params = [{transform_indices = @transform_0, window_bounds = array<i64: 4, 128>}, {transform_indices = @transform_1, window_bounds = array<i64: 1, 8, 128>}, {transform_indices = @transform_2, window_bounds = array<i64: 1, 8, 128>}]} {
    %c0_i32 = arith.constant 0 : i32
    %0 = arith.cmpi eq, %arg1, %c0_i32 : i32
    %1 = arith.extui %0 : i1 to i32
    %c0_i32_0 = arith.constant 0 : i32
    %2 = arith.cmpi ne, %1, %c0_i32_0 : i32
    scf.if %2 {
      %cst_13 = arith.constant 0.000000e+00 : f32
      %18 = vector.broadcast %cst_13 : f32 to vector<8x128xf32>
      %c0_14 = arith.constant 0 : index
      %c0_15 = arith.constant 0 : index
      %19 = vector.load %arg5[%c0_14, %c0_15] : memref<8x128xf32, #tpu.memory_space<vmem>>, vector<8x128xf32>
      tpu.vector_store %arg5[%c0_14, %c0_15], %18 {strides = array<i32>} : memref<8x128xf32, #tpu.memory_space<vmem>>, vector<8x128xf32>,
      %cst_16 = arith.constant 0.000000e+00 : f32
      %20 = vector.broadcast %cst_16 : f32 to vector<8x128xf32>
      %c0_17 = arith.constant 0 : index
      %c0_18 = arith.constant 0 : index
      %21 = vector.load %arg6[%c0_17, %c0_18] : memref<8x128xf32, #tpu.memory_space<vmem>>, vector<8x128xf32>
      tpu.vector_store %arg6[%c0_17, %c0_18], %20 {strides = array<i32>} : memref<8x128xf32, #tpu.memory_space<vmem>>, vector<8x128xf32>,
    } else {
    }
    %c0 = arith.constant 0 : index
    %c0_1 = arith.constant 0 : index
    %3 = vector.load %arg2[%c0, %c0_1] : memref<4x128xf32, #tpu.memory_space<vmem>>, vector<4x128xf32>
    %c0_2 = arith.constant 0 : index
    %c0_3 = arith.constant 0 : index
    %4 = vector.load %arg5[%c0_2, %c0_3] : memref<8x128xf32, #tpu.memory_space<vmem>>, vector<1x128xf32>
    %cst = arith.constant dense<0.000000e+00> : vector<128xf32>
    %5 = vector.multi_reduction <add>, %3, %cst [0] : vector<4x128xf32> to vector<128xf32>
    %6 = vector.shape_cast %5 : vector<128xf32> to vector<1x128xf32>
    %7 = arith.addf %4, %6 : vector<1x128xf32>
    %c0_4 = arith.constant 0 : index
    %c0_5 = arith.constant 0 : index
    %8 = vector.load %arg5[%c0_4, %c0_5] : memref<8x128xf32, #tpu.memory_space<vmem>>, vector<1x128xf32>
    tpu.vector_store %arg5[%c0_4, %c0_5], %7 {strides = array<i32>} : memref<8x128xf32, #tpu.memory_space<vmem>>, vector<1x128xf32>,
    %c0_6 = arith.constant 0 : index
    %c0_7 = arith.constant 0 : index
    %9 = vector.load %arg6[%c0_6, %c0_7] : memref<8x128xf32, #tpu.memory_space<vmem>>, vector<1x128xf32>
    %10 = arith.mulf %3, %3 : vector<4x128xf32>
    %cst_8 = arith.constant dense<0.000000e+00> : vector<128xf32>
    %11 = vector.multi_reduction <add>, %10, %cst_8 [0] : vector<4x128xf32> to vector<128xf32>
    %12 = vector.shape_cast %11 : vector<128xf32> to vector<1x128xf32>
    %13 = arith.addf %9, %12 : vector<1x128xf32>
    %c0_9 = arith.constant 0 : index
    %c0_10 = arith.constant 0 : index
    %14 = vector.load %arg6[%c0_9, %c0_10] : memref<8x128xf32, #tpu.memory_space<vmem>>, vector<1x128xf32>
    tpu.vector_store %arg6[%c0_9, %c0_10], %13 {strides = array<i32>} : memref<8x128xf32, #tpu.memory_space<vmem>>, vector<1x128xf32>,
    %c0_i32_11 = arith.constant 0 : i32
    %15 = arith.cmpi eq, %arg1, %c0_i32_11 : i32
    %16 = arith.extui %15 : i1 to i32
    %c0_i32_12 = arith.constant 0 : i32
    %17 = arith.cmpi ne, %16, %c0_i32_12 : i32
    scf.if %17 {
      %c0_13 = arith.constant 0 : index
      %c0_14 = arith.constant 0 : index
      %18 = vector.load %arg5[%c0_13, %c0_14] : memref<8x128xf32, #tpu.memory_space<vmem>>, vector<8x128xf32>
      %c0_15 = arith.constant 0 : index
      %c0_16 = arith.constant 0 : index
      %c0_17 = arith.constant 0 : index
      %19 = vector.load %arg3[%c0_15, %c0_16, %c0_17] : memref<1x8x128xf32, #tpu.memory_space<vmem>>, vector<1x8x128xf32>
      %20 = vector.shape_cast %19 : vector<1x8x128xf32> to vector<8x128xf32>
      %21 = vector.shape_cast %18 : vector<8x128xf32> to vector<1x8x128xf32>
      tpu.vector_store %arg3[%c0_15, %c0_16, %c0_17], %21 {strides = array<i32>} : memref<1x8x128xf32, #tpu.memory_space<vmem>>, vector<1x8x128xf32>,
      %c0_18 = arith.constant 0 : index
      %c0_19 = arith.constant 0 : index
      %22 = vector.load %arg6[%c0_18, %c0_19] : memref<8x128xf32, #tpu.memory_space<vmem>>, vector<8x128xf32>
      %c0_20 = arith.constant 0 : index
      %c0_21 = arith.constant 0 : index
      %c0_22 = arith.constant 0 : index
      %23 = vector.load %arg4[%c0_20, %c0_21, %c0_22] : memref<1x8x128xf32, #tpu.memory_space<vmem>>, vector<1x8x128xf32>
      %24 = vector.shape_cast %23 : vector<1x8x128xf32> to vector<8x128xf32>
      %25 = vector.shape_cast %22 : vector<8x128xf32> to vector<1x8x128xf32>
      tpu.vector_store %arg4[%c0_20, %c0_21, %c0_22], %25 {strides = array<i32>} : memref<1x8x128xf32, #tpu.memory_space<vmem>>, vector<1x8x128xf32>,
    } else {
    }
    return
  }
  func.func @transform_0(%arg0: i32, %arg1: i32) -> (i32, i32) {
    %c1_i32 = arith.constant 1 : i32
    %0 = arith.muli %arg0, %c1_i32 : i32
    %1 = arith.addi %0, %arg1 : i32
    %c0_i32 = arith.constant 0 : i32
    %c0_i32_0 = arith.constant 0 : i32
    return %1, %c0_i32 : i32, i32
  }
  func.func @transform_1(%arg0: i32, %arg1: i32) -> (i32, i32, i32) {
    %c0_i32 = arith.constant 0 : i32
    %c0_i32_0 = arith.constant 0 : i32
    %c0_i32_1 = arith.constant 0 : i32
    return %arg0, %c0_i32, %c0_i32_0 : i32, i32, i32
  }
  func.func @transform_2(%arg0: i32, %arg1: i32) -> (i32, i32, i32) {
    %c0_i32 = arith.constant 0 : i32
    %c0_i32_0 = arith.constant 0 : i32
    %c0_i32_1 = arith.constant 0 : i32
    return %arg0, %c0_i32, %c0_i32_0 : i32, i32, i32
  }
}

</mosaic_0001>

<llo_original>
// kernel: tpu_custom_call.1
$region0: #{tpu_custom_call.1}
  #allocation0 [shape = 'u32[]', space=smem, size = 0x4, offset = 0x4, fixed_abs, tag = 'smem constant byte address 0x4 - core index']
  #allocation1 [shape = 'u32[144,128]{1,0:T(1,128)}', space=vmem, size = 0x12000, scoped, tag = 'internal scratch']
  #allocation2 [shape = 'f32[8,128]{1,0:T(8,128)}', space=vmem, size = 0x1000, scoped, tag = 'scratch operand']
  #allocation3 [shape = 'f32[8,128]{1,0:T(8,128)}', space=vmem, size = 0x1000, scoped, tag = 'scratch operand']
  %s0 = inlined_call_operand.hbm [shape: f32[4,128], index: 0, kind: input, shape index: {}]
  %s1 = inlined_call_operand.hbm [shape: f32[1,8,128], index: 1, kind: output, shape index: {0}]
  %s2 = inlined_call_operand.hbm [shape: f32[1,8,128], index: 2, kind: output, shape index: {1}]
  %3 = xla_tuple %s1, %s2
  %s4 = sld [smem:[#allocation0]]
  $region34: #{tpu_custom_call.1} parent=0
    _
  %s6 = ssub.s32 1, %s4
  %s7 = scalar_select 0, %s6, %s4
  $region1: #{tpu_custom_call.1} parent=0
    #allocation4 [shape = 'u8[2048]{0}', space=vmem, size = 0x800, scoped, tag = 'input window, operand 0, single buffered']
    #allocation5 [shape = 's32[1]{0}', space=sflag, size = 0x4, scoped, tag = 'scoped memory for tpu_custom_call.1']
    #allocation6 [shape = 's32[1]{0}', space=sflag, size = 0x4, scoped, tag = 'scoped memory for tpu_custom_call.1']
    #allocation7 [shape = 'u8[4096]{0}', space=vmem, size = 0x1000, scoped, tag = 'output window, operand 0, single buffered']
    #allocation8 [shape = 'u8[4096]{0}', space=vmem, size = 0x1000, scoped, tag = 'output window, operand 1, single buffered']
    #allocation9 [shape = 's32[1]{0}', space=sflag, size = 0x4, scoped, tag = 'scoped memory for tpu_custom_call.1']
    %8 = vsyncpa [#allocation5], 0
    %9 = vsyncpa [#allocation6], 0
    %10 = vsyncpa [#allocation9], 0
    // Predicated region
    $region2: #{tpu_custom_call.1} parent=1 // pred_check
      _
    $region3: #{tpu_custom_call.1} parent=1 // pred_check_branch
      %12 = sbr.rel (0) target = $region5
    $region4: #{tpu_custom_call.1} parent=1 // pred_region
      %s13 = sadd.s32 0, 0
      %s15 = ssub.s32 64, 64
      %16 = vsyncadd [#allocation5], %s15
      %s17 = smul.addr %s13, 64
      %s18 = scalar_lea.hbm %s0, %s17
      %s20 = sshll.u32 [#allocation4], 4
      %s21 = int_to_ptr.vmem [resolvable:$true] %s20
      %23 = dma.hbm_to_vmem [thread:$0]  %s18, 64, %s21, [#allocation5]
    $region5: #{tpu_custom_call.1} parent=1 // pred_fallthru
      _
    // Predicated region
    $region6: #{tpu_custom_call.1} parent=1 // pred_check
      _
    $region7: #{tpu_custom_call.1} parent=1 // pred_check_branch
      %25 = sbr.rel (0) target = $region9
    $region8: #{tpu_custom_call.1} parent=1 // pred_region
      %26 = dma.done [#allocation5], 64
    $region9: #{tpu_custom_call.1} parent=1 // pred_fallthru
      _
    %s27 = sadd.s32 0, 0
    %p28 = scmp.eq.s32.totalorder 0, 0
    // Predicated region
    $region10: #{tpu_custom_call.1} parent=1 // pred_check
      %p29 = pneg %p28
    $region11: #{tpu_custom_call.1} parent=1 // pred_check_branch
      %31 = sbr.rel (%p29) target = $region13
    $region12: #{tpu_custom_call.1} parent=1 // pred_region
      %32 = vst [vmem:[#allocation2] sm:$0xff] 0.0
      %33 = vst [vmem:[#allocation3] sm:$0xff] 0.0
    $region13: #{tpu_custom_call.1} parent=1 // pred_fallthru
      _
    %v34 = vld [vmem:[#allocation4] sm:$0xf]
    %v35 = vld [vmem:[#allocation2] sm:$0x1]
    %vm36 = vcmask 1043456
    %v37 = vsel %vm36, %v34, 0.0
    %v38 = vrot.slane %v37, 4
    %v39 = vadd.f32 %v37, %v38
    %v40 = vrot.slane %v39, 2
    %v41 = vadd.f32 %v39, %v40
    %v42 = vrot.slane %v41, 1
    %v43 = vadd.f32 %v41, %v42
    %v44 = vadd.f32 %v35, %v43
    %45 = vst [vmem:[#allocation2] sm:$0x1] %v44
    %v46 = vld [vmem:[#allocation3] sm:$0x1]
    %v47 = vmul.f32 %v34, %v34
    %v48 = vsel %vm36, %v47, 0.0
    %v49 = vrot.slane %v48, 4
    %v50 = vadd.f32 %v48, %v49
    %v51 = vrot.slane %v50, 2
    %v52 = vadd.f32 %v50, %v51
    %v53 = vrot.slane %v52, 1
    %v54 = vadd.f32 %v52, %v53
    %v55 = vadd.f32 %v46, %v54
    %56 = vst [vmem:[#allocation3] sm:$0x1] %v55
    // Predicated region
    $region14: #{tpu_custom_call.1} parent=1 // pred_check
      %p57 = pneg %p28
    $region15: #{tpu_custom_call.1} parent=1 // pred_check_branch
      %59 = sbr.rel (%p57) target = $region17
    $region16: #{tpu_custom_call.1} parent=1 // pred_region
      %v60 = vld [vmem:[#allocation2] sm:$0xff]
      %61 = vst [vmem:[#allocation7] sm:$0xff] %v60
      %v62 = vld [vmem:[#allocation3] sm:$0xff]
      %63 = vst [vmem:[#allocation8] sm:$0xff] %v62
    $region17: #{tpu_custom_call.1} parent=1 // pred_fallthru
      _
    // Predicated region
    $region18: #{tpu_custom_call.1} parent=1 // pred_check
      _
    $region19: #{tpu_custom_call.1} parent=1 // pred_check_branch
      %65 = sbr.rel (0) target = $region21
    $region20: #{tpu_custom_call.1} parent=1 // pred_region
      %s67 = ssub.s32 128, 128
      %68 = vsyncadd [#allocation6], %s67
      %s70 = sshll.u32 [#allocation7], 4
      %s71 = int_to_ptr.vmem [resolvable:$true] %s70
      %73 = dma.vmem_to_hbm [thread:$0]  %s71, 128, %s1, [#allocation6]
    $region21: #{tpu_custom_call.1} parent=1 // pred_fallthru
      _
    // Predicated region
    $region22: #{tpu_custom_call.1} parent=1 // pred_check
      _
    $region23: #{tpu_custom_call.1} parent=1 // pred_check_branch
      %75 = sbr.rel (0) target = $region25
    $region24: #{tpu_custom_call.1} parent=1 // pred_region
      %s77 = ssub.s32 128, 128
      %78 = vsyncadd [#allocation9], %s77
      %s80 = sshll.u32 [#allocation8], 4
      %s81 = int_to_ptr.vmem [resolvable:$true] %s80
      %83 = dma.vmem_to_hbm [thread:$0]  %s81, 128, %s2, [#allocation9]
    $region25: #{tpu_custom_call.1} parent=1 // pred_fallthru
      _
    // Predicated region
    $region26: #{tpu_custom_call.1} parent=1 // pred_check
      _
    $region27: #{tpu_custom_call.1} parent=1 // pred_check_branch
      %85 = sbr.rel (0) target = $region29
    $region28: #{tpu_custom_call.1} parent=1 // pred_region
      %86 = dma.done [#allocation6], 128
    $region29: #{tpu_custom_call.1} parent=1 // pred_fallthru
      _
    // Predicated region
    $region30: #{tpu_custom_call.1} parent=1 // pred_check
      _
    $region31: #{tpu_custom_call.1} parent=1 // pred_check_branch
      %88 = sbr.rel (0) target = $region33
    $region32: #{tpu_custom_call.1} parent=1 // pred_region
      %89 = dma.done [#allocation9], 128
    $region33: #{tpu_custom_call.1} parent=1 // pred_fallthru
      _
    %90 = vsyncpa [#allocation5], 1
    %91 = vsyncpa [#allocation6], 1
    %92 = vsyncpa [#allocation9], 1

</llo_original>
